<compile_context>
chip_gen: v7x
topology: tpu7x:2x2x1
jax: 0.10.0
libtpu: 0.0.40
codegen_flags: <defaults>
</compile_context>

<pallas_src>
import functools
import math

import jax
import jax.numpy as jnp
from jax.experimental import pallas as pl
from jax.experimental.pallas import tpu as pltpu

HIDDEN = 128


def _round_up(x, m):
    return -(-x // m) * m


def _actor_prob_kernel(layer_num, max_action, unbounded, sig_off, compute_dtype,
                       s_ref, w0_ref, b0_ref, wh_ref, bh_ref,
                       whd_ref, bhd_ref, out_ref):
    # Input layer: Linear(state_dim -> 128) + ReLU (MXU matmul, f32 accumulate).
    h = jnp.dot(s_ref[...], w0_ref[...], preferred_element_type=jnp.float32)
    h = jnp.maximum(h + b0_ref[...], 0.0)

    # Hidden stack: layer_num x (Linear(128,128) + ReLU). layer_num is static,
    # so this unrolls at trace time.
    for l in range(layer_num):
        h = jnp.dot(h.astype(compute_dtype), wh_ref[l],
                    preferred_element_type=jnp.float32)
        h = jnp.maximum(h + bh_ref[l], 0.0)

    # Fused packed heads: one (TM,128) x (128, head_pad) matmul.
    # Lanes [0:sig_off) hold mu logits, lanes [sig_off:) hold sigma logits.
    heads = jnp.dot(h.astype(compute_dtype), whd_ref[...],
                    preferred_element_type=jnp.float32) + bhd_ref[...]

    lane = jax.lax.broadcasted_iota(jnp.int32, heads.shape, dimension=1)
    is_mu = lane < sig_off

    if unbounded:
        mu_vals = heads
    else:
        mu_vals = jnp.tanh(heads)
        if max_action != 1.0:          # trace-time check: skip the VPU multiply if 1.0
            mu_vals = max_action * mu_vals

    # TODO(synk): the reference applies no clamp to the sigma logits (exp can overflow
    # for extreme inputs); variants that clip log-sigma would add a jnp.clip here.
    out_ref[...] = jnp.where(is_mu, mu_vals, jnp.exp(heads)).astype(out_ref.dtype)


def prepare_params(params, *, layer_num, compute_dtype=jnp.bfloat16):
    """One-time padding / head packing of the weights (hoisted out of the hot path).

    Returns arrays only (jit/pytree friendly):
      w0 (dp,128)        dp = state_dim rounded to the sublane pack (NOT 128),
      b0 (1,128),
      wh (max(L,1),128,128), bh (max(L,1),1,128),
      w_head (128, head_pad), b_head (1, head_pad)
        with head_pad = round_up(2*action_dim, 128); mu weights in lanes
        [0:action_dim], sigma weights in lanes [head_pad//2 : head_pad//2+action_dim].
    Matmul weights stored in `compute_dtype`; biases kept f32.  (Keep an f32 master
    copy of the raw params for training; these prepared arrays are inference-only.)
    """
    state_dim = params["w0"].shape[0]
    action_dim = params["w_mu"].shape[1]
    cdt = jnp.dtype(compute_dtype)
    row_pack = 16 if cdt == jnp.bfloat16 else 8
    dp = _round_up(max(state_dim, 1), row_pack)
    head_pad = _round_up(2 * max(action_dim, 1), 128)
    sig_off = head_pad // 2          # >= action_dim by construction
    n_h = max(layer_num, 1)

    w0 = jnp.zeros((dp, HIDDEN), jnp.float32).at[:state_dim, :].set(params["w0"])
    b0 = params["b0"].reshape(1, HIDDEN).astype(jnp.float32)
    wh = jnp.zeros((n_h, HIDDEN, HIDDEN), jnp.float32).at[:layer_num].set(params["wh"])
    bh = jnp.zeros((n_h, 1, HIDDEN), jnp.float32).at[:layer_num].set(
        params["bh"].reshape(layer_num, 1, HIDDEN))

    w_head = jnp.zeros((HIDDEN, head_pad), jnp.float32)
    w_head = w_head.at[:, :action_dim].set(params["w_mu"])
    w_head = w_head.at[:, sig_off:sig_off + action_dim].set(params["w_sigma"])
    b_head = jnp.zeros((1, head_pad), jnp.float32)
    b_head = b_head.at[0, :action_dim].set(params["b_mu"])
    b_head = b_head.at[0, sig_off:sig_off + action_dim].set(params["b_sigma"])

    return {
        "w0": w0.astype(cdt), "b0": b0,
        "wh": wh.astype(cdt), "bh": bh,
        "w_head": w_head.astype(cdt), "b_head": b_head,
    }


def actor_prob_forward(s, prepared, *, layer_num, action_dim, max_action,
                       unbounded=False, out_dtype=jnp.float32):
    """s: (batch, *state_shape) float32. Returns ((mu, sigma), None)."""
    batch = s.shape[0]
    s2d = s.reshape(batch, -1).astype(jnp.float32)
    state_dim = s2d.shape[1]

    w0, b0 = prepared["w0"], prepared["b0"]
    wh, bh = prepared["wh"], prepared["bh"]
    w_head, b_head = prepared["w_head"], prepared["b_head"]
    dp = w0.shape[0]
    head_pad = w_head.shape[1]
    sig_off = head_pad // 2
    cdt = w0.dtype
    row_align = 16 if cdt == jnp.bfloat16 else 8

    # Batch tiling:
    #   * tiny batch  (<=32): one padded block, no grid overhead;
    #   * medium batch (<=2048): exactly 2 tiles so the "parallel" axis can shard
    #     across v7x's two TensorCores;
    #   * large batch: 1024-row tiles to amortise the ~0.35us per-grid-step overhead.
    if batch <= 32:
        tm = _round_up(batch, row_align)
        bp = tm
    elif batch <= 2048:
        tm = _round_up(-(-batch // 2), row_align)
        bp = 2 * tm
    else:
        tm = 1024
        bp = _round_up(batch, tm)
    grid = (bp // tm,)

    s_pad = jnp.pad(s2d, ((0, bp - batch), (0, dp - state_dim))).astype(cdt)

    kernel = functools.partial(_actor_prob_kernel, layer_num, float(max_action),
                               bool(unbounded), sig_off, cdt)

    def resident(arr):
        nd = arr.ndim
        return pl.BlockSpec(arr.shape, lambda i, _nd=nd: (0,) * _nd)

    out = pl.pallas_call(
        kernel,
        out_shape=jax.ShapeDtypeStruct((bp, head_pad), jnp.dtype(out_dtype)),
        grid=grid,
        in_specs=[
            # activations: tiled over batch; last dim == full array extent (no 128 pad)
            pl.BlockSpec((tm, dp), lambda i: (i, 0)),
            resident(w0), resident(b0),                   # weights: VMEM-resident
            resident(wh), resident(bh),
            resident(w_head), resident(b_head),
        ],
        out_specs=pl.BlockSpec((tm, head_pad), lambda i: (i, 0)),
        compiler_params=pltpu.CompilerParams(
            dimension_semantics=("parallel",),
            vmem_limit_bytes=32 * 1024 * 1024),
    )(s_pad, w0, b0, wh, bh, w_head, b_head)

    mu = out[:batch, :action_dim]
    sigma = out[:batch, sig_off:sig_off + action_dim]
    return (mu, sigma), None


def init_params(key, state_dim, action_dim, layer_num, scale=0.1):
    ks = jax.random.split(key, 8)
    return {
        "w0": scale * jax.random.normal(ks[0], (state_dim, HIDDEN), jnp.float32),
        "b0": scale * jax.random.normal(ks[1], (HIDDEN,), jnp.float32),
        "wh": scale * jax.random.normal(ks[2], (layer_num, HIDDEN, HIDDEN), jnp.float32),
        "bh": scale * jax.random.normal(ks[3], (layer_num, HIDDEN), jnp.float32),
        "w_mu": scale * jax.random.normal(ks[4], (HIDDEN, action_dim), jnp.float32),
        "b_mu": scale * jax.random.normal(ks[5], (action_dim,), jnp.float32),
        "w_sigma": scale * jax.random.normal(ks[6], (HIDDEN, action_dim), jnp.float32),
        "b_sigma": scale * jax.random.normal(ks[7], (action_dim,), jnp.float32),
    }


def _reference(s, params, layer_num, max_action):
    x = s.reshape(s.shape[0], -1)
    h = jnp.maximum(x @ params["w0"] + params["b0"], 0.0)
    for l in range(layer_num):
        h = jnp.maximum(h @ params["wh"][l] + params["bh"][l], 0.0)
    mu = max_action * jnp.tanh(h @ params["w_mu"] + params["b_mu"])
    sigma = jnp.exp(h @ params["w_sigma"] + params["b_sigma"])
    return mu, sigma


if __name__ == "__main__":
    layer_num = 2
    state_shape = (16,)
    action_shape = (4,)
    max_action = 1.0
    batch = 2

    state_dim = math.prod(state_shape)
    action_dim = math.prod(action_shape)

    key = jax.random.PRNGKey(0)
    k_params, k_s, k_s2 = jax.random.split(key, 3)
    params = init_params(k_params, state_dim, action_dim, layer_num)
    s = jax.random.normal(k_s, (batch,) + state_shape, jnp.float32)

    fwd = jax.jit(actor_prob_forward,
                  static_argnames=("layer_num", "action_dim", "max_action",
                                   "unbounded", "out_dtype"))

    mu_ref, sigma_ref = _reference(s, params, layer_num, max_action)

    # f32 matmul path (single padded block): tight check against pure-JAX reference.
    prep_f32 = prepare_params(params, layer_num=layer_num, compute_dtype=jnp.float32)
    (mu, sigma), state = fwd(s, prep_f32, layer_num=layer_num, action_dim=action_dim,
                             max_action=max_action)
    mu, sigma = jax.block_until_ready((mu, sigma))
    assert state is None
    assert mu.shape == (batch, action_dim) and sigma.shape == (batch, action_dim)
    assert jnp.allclose(mu, mu_ref, atol=1e-5, rtol=1e-5)
    assert jnp.allclose(sigma, sigma_ref, atol=1e-5, rtol=1e-5)

    # Medium batch exercises the 2-tile ("parallel" over 2 cores) path.
    s_med = jax.random.normal(k_s2, (40,) + state_shape, jnp.float32)
    mu_ref_m, sigma_ref_m = _reference(s_med, params, layer_num, max_action)
    (mu_m, sigma_m), _ = fwd(s_med, prep_f32, layer_num=layer_num,
                             action_dim=action_dim, max_action=max_action)
    mu_m, sigma_m = jax.block_until_ready((mu_m, sigma_m))
    assert jnp.allclose(mu_m, mu_ref_m, atol=1e-5, rtol=1e-5)
    assert jnp.allclose(sigma_m, sigma_ref_m, atol=1e-5, rtol=1e-5)

    # bf16 matmul operands (f32 accumulate + f32 epilogue): looser tolerance.
    prep_bf16 = prepare_params(params, layer_num=layer_num, compute_dtype=jnp.bfloat16)
    (mu_b, sigma_b), _ = fwd(s, prep_bf16, layer_num=layer_num, action_dim=action_dim,
                             max_action=max_action)
    mu_b, sigma_b = jax.block_until_ready((mu_b, sigma_b))
    assert jnp.allclose(mu_b, mu_ref, atol=5e-2, rtol=5e-2)
    assert jnp.allclose(sigma_b, sigma_ref, atol=5e-2, rtol=5e-2)

    print("KERNEL_OK")
</pallas_src>

<mosaic_0001>
module attributes {stable_mosaic.version = 11 : i64} {
  func.func @_actor_prob_kernel(%arg0: i32, %arg1: memref<8x16xf32, #tpu.memory_space<vmem>>, %arg2: memref<16x128xf32, #tpu.memory_space<vmem>>, %arg3: memref<1x128xf32, #tpu.memory_space<vmem>>, %arg4: memref<2x128x128xf32, #tpu.memory_space<vmem>>, %arg5: memref<2x1x128xf32, #tpu.memory_space<vmem>>, %arg6: memref<128x128xf32, #tpu.memory_space<vmem>>, %arg7: memref<1x128xf32, #tpu.memory_space<vmem>>, %arg8: memref<8x128xf32, #tpu.memory_space<vmem>>) attributes {dimension_semantics = [#tpu.dimension_semantics<parallel>], iteration_bounds = array<i64: 1>, scalar_prefetch = 0 : i64, scratch_operands = 0 : i64, tpu.core_type = #tpu.core_type<tc>, window_params = [{transform_indices = @transform_0, window_bounds = array<i64: 8, 16>}, {pipeline_mode = #tpu.pipeline_mode<synchronous>, transform_indices = @transform_1, window_bounds = array<i64: 16, 128>}, {pipeline_mode = #tpu.pipeline_mode<synchronous>, transform_indices = @transform_2, window_bounds = array<i64: 1, 128>}, {pipeline_mode = #tpu.pipeline_mode<synchronous>, transform_indices = @transform_3, window_bounds = array<i64: 2, 128, 128>}, {pipeline_mode = #tpu.pipeline_mode<synchronous>, transform_indices = @transform_4, window_bounds = array<i64: 2, 1, 128>}, {pipeline_mode = #tpu.pipeline_mode<synchronous>, transform_indices = @transform_5, window_bounds = array<i64: 128, 128>}, {pipeline_mode = #tpu.pipeline_mode<synchronous>, transform_indices = @transform_6, window_bounds = array<i64: 1, 128>}, {transform_indices = @transform_7, window_bounds = array<i64: 8, 128>}]} {
    %c0 = arith.constant 0 : index
    %c0_0 = arith.constant 0 : index
    %0 = vector.load %arg1[%c0, %c0_0] : memref<8x16xf32, #tpu.memory_space<vmem>>, vector<8x16xf32>
    %c0_1 = arith.constant 0 : index
    %c0_2 = arith.constant 0 : index
    %1 = vector.load %arg2[%c0_1, %c0_2] : memref<16x128xf32, #tpu.memory_space<vmem>>, vector<16x128xf32>
    %cst = arith.constant dense<0.000000e+00> : vector<8x128xf32>
    %2 = tpu.matmul %0, %1, %cst {dimension_numbers = #tpu.dot_dimension_numbers<[1], [0], [0], [1], [0, 0, 1, 1], [], []>} : vector<8x16xf32>, vector<16x128xf32>, vector<8x128xf32> -> vector<8x128xf32>
    %c0_3 = arith.constant 0 : index
    %c0_4 = arith.constant 0 : index
    %3 = vector.load %arg3[%c0_3, %c0_4] : memref<1x128xf32, #tpu.memory_space<vmem>>, vector<1x128xf32>
    %4 = vector.broadcast %3 : vector<1x128xf32> to vector<8x128xf32>
    %5 = arith.addf %2, %4 : vector<8x128xf32>
    %cst_5 = arith.constant 0.000000e+00 : f32
    %6 = vector.broadcast %cst_5 : f32 to vector<8x128xf32>
    %7 = arith.maximumf %5, %6 : vector<8x128xf32>
    %c0_6 = arith.constant 0 : index
    %c0_7 = arith.constant 0 : index
    %c0_8 = arith.constant 0 : index
    %8 = vector.load %arg4[%c0_6, %c0_7, %c0_8] : memref<2x128x128xf32, #tpu.memory_space<vmem>>, vector<1x128x128xf32>
    %9 = vector.shape_cast %8 : vector<1x128x128xf32> to vector<128x128xf32>
    %cst_9 = arith.constant dense<0.000000e+00> : vector<8x128xf32>
    %10 = tpu.matmul %7, %9, %cst_9 {dimension_numbers = #tpu.dot_dimension_numbers<[1], [0], [0], [1], [0, 0, 1, 1], [], []>} : vector<8x128xf32>, vector<128x128xf32>, vector<8x128xf32> -> vector<8x128xf32>
    %c0_10 = arith.constant 0 : index
    %c0_11 = arith.constant 0 : index
    %c0_12 = arith.constant 0 : index
    %11 = vector.load %arg5[%c0_10, %c0_11, %c0_12] : memref<2x1x128xf32, #tpu.memory_space<vmem>>, vector<1x1x128xf32>
    %12 = vector.shape_cast %11 : vector<1x1x128xf32> to vector<1x128xf32>
    %13 = vector.broadcast %12 : vector<1x128xf32> to vector<8x128xf32>
    %14 = arith.addf %10, %13 : vector<8x128xf32>
    %cst_13 = arith.constant 0.000000e+00 : f32
    %15 = vector.broadcast %cst_13 : f32 to vector<8x128xf32>
    %16 = arith.maximumf %14, %15 : vector<8x128xf32>
    %c1 = arith.constant 1 : index
    %c0_14 = arith.constant 0 : index
    %c0_15 = arith.constant 0 : index
    %17 = vector.load %arg4[%c1, %c0_14, %c0_15] : memref<2x128x128xf32, #tpu.memory_space<vmem>>, vector<1x128x128xf32>
    %18 = vector.shape_cast %17 : vector<1x128x128xf32> to vector<128x128xf32>
    %cst_16 = arith.constant dense<0.000000e+00> : vector<8x128xf32>
    %19 = tpu.matmul %16, %18, %cst_16 {dimension_numbers = #tpu.dot_dimension_numbers<[1], [0], [0], [1], [0, 0, 1, 1], [], []>} : vector<8x128xf32>, vector<128x128xf32>, vector<8x128xf32> -> vector<8x128xf32>
    %c1_17 = arith.constant 1 : index
    %c0_18 = arith.constant 0 : index
    %c0_19 = arith.constant 0 : index
    %20 = vector.load %arg5[%c1_17, %c0_18, %c0_19] : memref<2x1x128xf32, #tpu.memory_space<vmem>>, vector<1x1x128xf32>
    %21 = vector.shape_cast %20 : vector<1x1x128xf32> to vector<1x128xf32>
    %22 = vector.broadcast %21 : vector<1x128xf32> to vector<8x128xf32>
    %23 = arith.addf %19, %22 : vector<8x128xf32>
    %cst_20 = arith.constant 0.000000e+00 : f32
    %24 = vector.broadcast %cst_20 : f32 to vector<8x128xf32>
    %25 = arith.maximumf %23, %24 : vector<8x128xf32>
    %c0_21 = arith.constant 0 : index
    %c0_22 = arith.constant 0 : index
    %26 = vector.load %arg6[%c0_21, %c0_22] : memref<128x128xf32, #tpu.memory_space<vmem>>, vector<128x128xf32>
    %cst_23 = arith.constant dense<0.000000e+00> : vector<8x128xf32>
    %27 = tpu.matmul %25, %26, %cst_23 {dimension_numbers = #tpu.dot_dimension_numbers<[1], [0], [0], [1], [0, 0, 1, 1], [], []>} : vector<8x128xf32>, vector<128x128xf32>, vector<8x128xf32> -> vector<8x128xf32>
    %c0_24 = arith.constant 0 : index
    %c0_25 = arith.constant 0 : index
    %28 = vector.load %arg7[%c0_24, %c0_25] : memref<1x128xf32, #tpu.memory_space<vmem>>, vector<1x128xf32>
    %29 = vector.broadcast %28 : vector<1x128xf32> to vector<8x128xf32>
    %30 = arith.addf %27, %29 : vector<8x128xf32>
    %31 = tpu.iota {dimensions = array<i32: 1>} : vector<8x128xi32>
    %c64_i32 = arith.constant 64 : i32
    %32 = vector.broadcast %c64_i32 : i32 to vector<8x128xi32>
    %33 = arith.cmpi slt, %31, %32 : vector<8x128xi32>
    %34 = math.tanh %30 : vector<8x128xf32>
    %35 = math.exp %30 : vector<8x128xf32>
    %36 = arith.select %33, %34, %35 : vector<8x128xi1>, vector<8x128xf32>
    %c0_26 = arith.constant 0 : index
    %c0_27 = arith.constant 0 : index
    %37 = vector.load %arg8[%c0_26, %c0_27] : memref<8x128xf32, #tpu.memory_space<vmem>>, vector<8x128xf32>
    tpu.vector_store %arg8[%c0_26, %c0_27], %36 {strides = array<i32>} : memref<8x128xf32, #tpu.memory_space<vmem>>, vector<8x128xf32>,
    return
  }
  func.func @transform_0(%arg0: i32) -> (i32, i32) {
    %c0_i32 = arith.constant 0 : i32
    %c0_i32_0 = arith.constant 0 : i32
    return %arg0, %c0_i32 : i32, i32
  }
  func.func @transform_1(%arg0: i32) -> (i32, i32) {
    %c0_i32 = arith.constant 0 : i32
    %c0_i32_0 = arith.constant 0 : i32
    %c0_i32_1 = arith.constant 0 : i32
    return %c0_i32, %c0_i32_0 : i32, i32
  }
  func.func @transform_2(%arg0: i32) -> (i32, i32) {
    %c0_i32 = arith.constant 0 : i32
    %c0_i32_0 = arith.constant 0 : i32
    %c0_i32_1 = arith.constant 0 : i32
    return %c0_i32, %c0_i32_0 : i32, i32
  }
  func.func @transform_3(%arg0: i32) -> (i32, i32, i32) {
    %c0_i32 = arith.constant 0 : i32
    %c0_i32_0 = arith.constant 0 : i32
    %c0_i32_1 = arith.constant 0 : i32
    %c0_i32_2 = arith.constant 0 : i32
    return %c0_i32, %c0_i32_0, %c0_i32_1 : i32, i32, i32
  }
  func.func @transform_4(%arg0: i32) -> (i32, i32, i32) {
    %c0_i32 = arith.constant 0 : i32
    %c0_i32_0 = arith.constant 0 : i32
    %c0_i32_1 = arith.constant 0 : i32
    %c0_i32_2 = arith.constant 0 : i32
    return %c0_i32, %c0_i32_0, %c0_i32_1 : i32, i32, i32
  }
  func.func @transform_5(%arg0: i32) -> (i32, i32) {
    %c0_i32 = arith.constant 0 : i32
    %c0_i32_0 = arith.constant 0 : i32
    %c0_i32_1 = arith.constant 0 : i32
    return %c0_i32, %c0_i32_0 : i32, i32
  }
  func.func @transform_6(%arg0: i32) -> (i32, i32) {
    %c0_i32 = arith.constant 0 : i32
    %c0_i32_0 = arith.constant 0 : i32
    %c0_i32_1 = arith.constant 0 : i32
    return %c0_i32, %c0_i32_0 : i32, i32
  }
  func.func @transform_7(%arg0: i32) -> (i32, i32) {
    %c0_i32 = arith.constant 0 : i32
    %c0_i32_0 = arith.constant 0 : i32
    return %arg0, %c0_i32 : i32, i32
  }
}

</mosaic_0001>

<llo_original>
// kernel: actor_prob_forward.1
$region0: #{actor_prob_forward.1}
  #allocation0 [shape = 'u32[]', space=smem, size = 0x4, offset = 0x4, fixed_abs, tag = 'smem constant byte address 0x4 - core index']
  #allocation1 [shape = 'u32[144,128]{1,0:T(1,128)}', space=vmem, size = 0x12000, scoped, tag = 'internal scratch']
  %s0 = inlined_call_operand.vmem [shape: f32[8,16], index: 0, kind: input, shape index: {}]
  %s1 = inlined_call_operand.vmem [shape: f32[16,128], index: 1, kind: input, shape index: {}]
  %s2 = inlined_call_operand.vmem [shape: f32[1,128], index: 2, kind: input, shape index: {}]
  %s3 = inlined_call_operand.hbm [shape: f32[2,128,128], index: 3, kind: input, shape index: {}]
  %s4 = inlined_call_operand.vmem [shape: f32[2,1,128], index: 4, kind: input, shape index: {}]
  %s5 = inlined_call_operand.hbm [shape: f32[128,128], index: 5, kind: input, shape index: {}]
  %s6 = inlined_call_operand.vmem [shape: f32[1,128], index: 6, kind: input, shape index: {}]
  %s7 = inlined_call_operand.vmem [shape: f32[8,128], index: 7, kind: output, shape index: {}]
  %s8 = sld [smem:[#allocation0]]
  $region46: #{actor_prob_forward.1} parent=0
    _
  %s10 = ssub.s32 1, %s8
  %s11 = scalar_select 0, %s10, %s8
  $region1: #{actor_prob_forward.1} parent=0
    #allocation2 [shape = 'u8[131072]{0}', space=vmem, size = 0x20000, scoped, tag = 'input window, operand 3, single buffered']
    #allocation3 [shape = 's32[1]{0}', space=sflag, size = 0x4, scoped, tag = 'scoped memory for actor_prob_forward.1']
    #allocation4 [shape = 'u8[65536]{0}', space=vmem, size = 0x10000, scoped, tag = 'input window, operand 5, single buffered']
    #allocation5 [shape = 's32[1]{0}', space=sflag, size = 0x4, scoped, tag = 'scoped memory for actor_prob_forward.1']
    %12 = vsyncpa [#allocation3], 0
    %13 = vsyncpa [#allocation5], 0
    // Predicated region
    $region2: #{actor_prob_forward.1} parent=1 // pred_check
      _
    $region3: #{actor_prob_forward.1} parent=1 // pred_check_branch
      %15 = sbr.rel (0) target = $region5
    $region4: #{actor_prob_forward.1} parent=1 // pred_region
      _
    $region5: #{actor_prob_forward.1} parent=1 // pred_fallthru
      _
    // Predicated region
    $region6: #{actor_prob_forward.1} parent=1 // pred_check
      _
    $region7: #{actor_prob_forward.1} parent=1 // pred_check_branch
      %17 = sbr.rel (0) target = $region9
    $region8: #{actor_prob_forward.1} parent=1 // pred_region
      _
    $region9: #{actor_prob_forward.1} parent=1 // pred_fallthru
      _
    // Predicated region
    $region10: #{actor_prob_forward.1} parent=1 // pred_check
      _
    $region11: #{actor_prob_forward.1} parent=1 // pred_check_branch
      %19 = sbr.rel (0) target = $region13
    $region12: #{actor_prob_forward.1} parent=1 // pred_region
      _
    $region13: #{actor_prob_forward.1} parent=1 // pred_fallthru
      _
    // Predicated region
    $region14: #{actor_prob_forward.1} parent=1 // pred_check
      _
    $region15: #{actor_prob_forward.1} parent=1 // pred_check_branch
      %21 = sbr.rel (0) target = $region17
    $region16: #{actor_prob_forward.1} parent=1 // pred_region
      %s23 = ssub.s32 4096, 4096
      %24 = vsyncadd [#allocation3], %s23
      %s25 = sshll.u32 [#allocation2], 4
      %s26 = int_to_ptr.vmem [resolvable:$true] %s25
      %31 = dma.hbm_to_vmem [thread:$0]  %s3, 4096, %s26, [#allocation3], 128, 128, 8
    $region17: #{actor_prob_forward.1} parent=1 // pred_fallthru
      _
    // Predicated region
    $region18: #{actor_prob_forward.1} parent=1 // pred_check
      _
    $region19: #{actor_prob_forward.1} parent=1 // pred_check_branch
      %33 = sbr.rel (0) target = $region21
    $region20: #{actor_prob_forward.1} parent=1 // pred_region
      _
    $region21: #{actor_prob_forward.1} parent=1 // pred_fallthru
      _
    // Predicated region
    $region22: #{actor_prob_forward.1} parent=1 // pred_check
      _
    $region23: #{actor_prob_forward.1} parent=1 // pred_check_branch
      %35 = sbr.rel (0) target = $region25
    $region24: #{actor_prob_forward.1} parent=1 // pred_region
      %s37 = ssub.s32 2048, 2048
      %38 = vsyncadd [#allocation5], %s37
      %s39 = sshll.u32 [#allocation4], 4
      %s40 = int_to_ptr.vmem [resolvable:$true] %s39
      %45 = dma.hbm_to_vmem [thread:$0]  %s5, 2048, %s40, [#allocation5], 128, 128, 8
    $region25: #{actor_prob_forward.1} parent=1 // pred_fallthru
      _
    // Predicated region
    $region26: #{actor_prob_forward.1} parent=1 // pred_check
      _
    $region27: #{actor_prob_forward.1} parent=1 // pred_check_branch
      %47 = sbr.rel (0) target = $region29
    $region28: #{actor_prob_forward.1} parent=1 // pred_region
      _
    $region29: #{actor_prob_forward.1} parent=1 // pred_fallthru
      _
    // Predicated region
    $region30: #{actor_prob_forward.1} parent=1 // pred_check
      _
    $region31: #{actor_prob_forward.1} parent=1 // pred_check_branch
      %49 = sbr.rel (0) target = $region33
    $region32: #{actor_prob_forward.1} parent=1 // pred_region
      %50 = dma.done [#allocation3], 4096
    $region33: #{actor_prob_forward.1} parent=1 // pred_fallthru
      _
    // Predicated region
    $region34: #{actor_prob_forward.1} parent=1 // pred_check
      _
    $region35: #{actor_prob_forward.1} parent=1 // pred_check_branch
      %52 = sbr.rel (0) target = $region37
    $region36: #{actor_prob_forward.1} parent=1 // pred_region
      %53 = dma.done [#allocation5], 2048
    $region37: #{actor_prob_forward.1} parent=1 // pred_fallthru
      _
    %v54 = vld [vmem:[%s0] sm:$0xff]
    %v55 = vld [vmem:[%s1] sm:$0xff]
    %v56 = vld [vmem:[%s1 + $0x8] sm:$0xff]
    %v57 = vld [vmem:[%s2] sm:$0x1]
    %v59 = vlaneseq
    %v60 = vshrl.u32 %v59, 7
    %v61 = vsub.s32 0, %v60
    %v62 = vrot.slane %v57, %v61
    %vm64 = vcmask 130048
    %v66 = vsel %vm64, %v54, 0
    %68 = vmatprep.subr.mxu0 0.0
    %69 = vmatpush1.msra.mxu0 %v55
    %70 = vmatprep.subr.mxu0 0.0
    %71 = vmatpush1.msra.mxu0 %v56
    %72 = vmatprep.subr.mxu0 0.0
    %73 = vmatpush1.msra.mxu0 0.0
    %74 = vmatprep.subr.mxu0 0.0
    %75 = vmatpush1.msra.mxu0 0.0
    %76 = vmatprep.subr.mxu0 0.0
    %77 = vmatpush1.msra.mxu0 0.0
    %78 = vmatprep.subr.mxu0 0.0
    %79 = vmatpush1.msra.mxu0 0.0
    %80 = vmatprep.subr.mxu0 0.0
    %81 = vmatpush1.msra.mxu0 0.0
    %82 = vmatprep.subr.mxu0 0.0
    %83 = vmatpush1.msra.mxu0 0.0
    %84 = vmatprep.subr.mxu0 0.0
    %85 = vmatpush1.msra.mxu0 0.0
    %86 = vmatprep.subr.mxu0 0.0
    %87 = vmatpush1.msra.mxu0 0.0
    %88 = vmatprep.subr.mxu0 0.0
    %89 = vmatpush1.msra.mxu0 0.0
    %90 = vmatprep.subr.mxu0 0.0
    %91 = vmatpush1.msra.mxu0 0.0
    %92 = vmatprep.subr.mxu0 0.0
    %93 = vmatpush1.msra.mxu0 0.0
    %94 = vmatprep.subr.mxu0 0.0
    %95 = vmatpush1.msra.mxu0 0.0
    %96 = vmatprep.subr.mxu0 0.0
    %97 = vmatpush1.msra.mxu0 0.0
    %98 = vmatprep.subr.mxu0 0.0
    %99 = vmatpush1.msra.mxu0 0.0
    %100 = vmatprep.subr.mxu0 0.0
    %101 = vmatpush1.msra.mxu0 0.0
    %102 = vmatprep.subr.mxu0 0.0
    %103 = vmatpush1.msra.mxu0 0.0
    %104 = vmatprep.subr.mxu0 0.0
    %105 = vmatpush1.msra.mxu0 0.0
    %106 = vmatprep.subr.mxu0 0.0
    %107 = vmatpush1.msra.mxu0 0.0
    %108 = vmatprep.subr.mxu0 0.0
    %109 = vmatpush1.msra.mxu0 0.0
    %110 = vmatprep.subr.mxu0 0.0
    %111 = vmatpush1.msra.mxu0 0.0
    %112 = vmatprep.subr.mxu0 0.0
    %113 = vmatpush1.msra.mxu0 0.0
    %114 = vmatprep.subr.mxu0 0.0
    %115 = vmatpush1.msra.mxu0 0.0
    %116 = vmatprep.subr.mxu0 0.0
    %117 = vmatpush1.msra.mxu0 0.0
    %118 = vmatprep.subr.mxu0 0.0
    %119 = vmatpush1.msra.mxu0 0.0
    %120 = vmatprep.subr.mxu0 0.0
    %121 = vmatpush1.msra.mxu0 0.0
    %122 = vmatprep.subr.mxu0 0.0
    %123 = vmatpush1.msra.mxu0 0.0
    %124 = vmatprep.subr.mxu0 0.0
    %125 = vmatpush1.msra.mxu0 0.0
    %126 = vmatprep.subr.mxu0 0.0
    %127 = vmatpush1.msra.mxu0 0.0
    %128 = vmatprep.subr.mxu0 0.0
    %129 = vmatpush1.msra.mxu0 0.0
    %130 = vmatprep.subr.mxu0 0.0
    %131 = vmatpush1.msra.mxu0 0.0
    %132 = vmatprep.mubr.f32.mxu0 0.0
    %133 = vmatmul.mubr.f32.gmra.mrb[0].mxu0 %v66
    %v134 = vpop.f32.mrb[0].mxu0
    %v135 = vadd.f32 %v62, %v134
    %v136 = vpop.f32.mrb[0].mxu0
    %137 = vdwg.mxu0
    %v138 = vmax.f32 %v135, 0.0
    %v139 = vld [vmem:[#allocation2] sm:$0xff]
    %v140 = vld [vmem:[#allocation2 + $0x8] sm:$0xff]
    %v141 = vld [vmem:[#allocation2 + $0x10] sm:$0xff]
    %v142 = vld [vmem:[#allocation2 + $0x18] sm:$0xff]
    %v143 = vld [vmem:[#allocation2 + $0x20] sm:$0xff]
    %v144 = vld [vmem:[#allocation2 + $0x28] sm:$0xff]
    %v145 = vld [vmem:[#allocation2 + $0x30] sm:$0xff]
    %v146 = vld [vmem:[#allocation2 + $0x38] sm:$0xff]
    %v147 = vld [vmem:[#allocation2 + $0x40] sm:$0xff]
    %v148 = vld [vmem:[#allocation2 + $0x48] sm:$0xff]
    %v149 = vld [vmem:[#allocation2 + $0x50] sm:$0xff]
    %v150 = vld [vmem:[#allocation2 + $0x58] sm:$0xff]
    %v151 = vld [vmem:[#allocation2 + $0x60] sm:$0xff]
    %v152 = vld [vmem:[#allocation2 + $0x68] sm:$0xff]
    %v153 = vld [vmem:[#allocation2 + $0x70] sm:$0xff]
    %v154 = vld [vmem:[#allocation2 + $0x78] sm:$0xff]
    %v155 = vld [vmem:[%s4] sm:$0x1]
    %v157 = vlaneseq
    %v158 = vshrl.u32 %v157, 7
    %v159 = vsub.s32 0, %v158
    %v160 = vrot.slane %v155, %v159
    %162 = vmatprep.subr.mxu0 0.0
    %163 = vmatpush1.msra.mxu0 %v139
    %164 = vmatprep.subr.mxu0 0.0
    %165 = vmatpush1.msra.mxu0 %v140
    %166 = vmatprep.subr.mxu0 0.0
    %167 = vmatpush1.msra.mxu0 %v141
    %168 = vmatprep.subr.mxu0 0.0
    %169 = vmatpush1.msra.mxu0 %v142
    %170 = vmatprep.subr.mxu0 0.0
    %171 = vmatpush1.msra.mxu0 %v143
    %172 = vmatprep.subr.mxu0 0.0
    %173 = vmatpush1.msra.mxu0 %v144
    %174 = vmatprep.subr.mxu0 0.0
    %175 = vmatpush1.msra.mxu0 %v145
    %176 = vmatprep.subr.mxu0 0.0
    %177 = vmatpush1.msra.mxu0 %v146
    %178 = vmatprep.subr.mxu0 0.0
    %179 = vmatpush1.msra.mxu0 %v147
    %180 = vmatprep.subr.mxu0 0.0
    %181 = vmatpush1.msra.mxu0 %v148
    %182 = vmatprep.subr.mxu0 0.0
    %183 = vmatpush1.msra.mxu0 %v149
    %184 = vmatprep.subr.mxu0 0.0
    %185 = vmatpush1.msra.mxu0 %v150
    %186 = vmatprep.subr.mxu0 0.0
    %187 = vmatpush1.msra.mxu0 %v151
    %188 = vmatprep.subr.mxu0 0.0
    %189 = vmatpush1.msra.mxu0 %v152
    %190 = vmatprep.subr.mxu0 0.0
    %191 = vmatpush1.msra.mxu0 %v153
    %192 = vmatprep.subr.mxu0 0.0
    %193 = vmatpush1.msra.mxu0 %v154
    %194 = vmatprep.subr.mxu0 0.0
    %195 = vmatpush1.msra.mxu0 0.0
    %196 = vmatprep.subr.mxu0 0.0
    %197 = vmatpush1.msra.mxu0 0.0
    %198 = vmatprep.subr.mxu0 0.0
    %199 = vmatpush1.msra.mxu0 0.0
    %200 = vmatprep.subr.mxu0 0.0
    %201 = vmatpush1.msra.mxu0 0.0
    %202 = vmatprep.subr.mxu0 0.0
    %203 = vmatpush1.msra.mxu0 0.0
    %204 = vmatprep.subr.mxu0 0.0
    %205 = vmatpush1.msra.mxu0 0.0
    %206 = vmatprep.subr.mxu0 0.0
    %207 = vmatpush1.msra.mxu0 0.0
    %208 = vmatprep.subr.mxu0 0.0
    %209 = vmatpush1.msra.mxu0 0.0
    %210 = vmatprep.subr.mxu0 0.0
    %211 = vmatpush1.msra.mxu0 0.0
    %212 = vmatprep.subr.mxu0 0.0
    %213 = vmatpush1.msra.mxu0 0.0
    %214 = vmatprep.subr.mxu0 0.0
    %215 = vmatpush1.msra.mxu0 0.0
    %216 = vmatprep.subr.mxu0 0.0
    %217 = vmatpush1.msra.mxu0 0.0
    %218 = vmatprep.subr.mxu0 0.0
    %219 = vmatpush1.msra.mxu0 0.0
    %220 = vmatprep.subr.mxu0 0.0
    %221 = vmatpush1.msra.mxu0 0.0
    %222 = vmatprep.subr.mxu0 0.0
    %223 = vmatpush1.msra.mxu0 0.0
    %224 = vmatprep.subr.mxu0 0.0
    %225 = vmatpush1.msra.mxu0 0.0
    %226 = vmatprep.mubr.f32.mxu0 0.0
    %227 = vmatmul.mubr.f32.gmra.mrb[0].mxu0 %v138
    %v228 = vpop.f32.mrb[0].mxu0
    %v229 = vadd.f32 %v160, %v228
    %v230 = vpop.f32.mrb[0].mxu0
    %231 = vdwg.mxu0
    %v232 = vmax.f32 %v229, 0.0
    %s233 = scalar_lea.vmem [#allocation2], 128
    %v234 = vld [vmem:[%s233] sm:$0xff]
    %v235 = vld [vmem:[%s233 + $0x8] sm:$0xff]
    %v236 = vld [vmem:[%s233 + $0x10] sm:$0xff]
    %v237 = vld [vmem:[%s233 + $0x18] sm:$0xff]
    %v238 = vld [vmem:[%s233 + $0x20] sm:$0xff]
    %v239 = vld [vmem:[%s233 + $0x28] sm:$0xff]
    %v240 = vld [vmem:[%s233 + $0x30] sm:$0xff]
    %v241 = vld [vmem:[%s233 + $0x38] sm:$0xff]
    %v242 = vld [vmem:[%s233 + $0x40] sm:$0xff]
    %v243 = vld [vmem:[%s233 + $0x48] sm:$0xff]
    %v244 = vld [vmem:[%s233 + $0x50] sm:$0xff]
    %v245 = vld [vmem:[%s233 + $0x58] sm:$0xff]
    %v246 = vld [vmem:[%s233 + $0x60] sm:$0xff]
    %v247 = vld [vmem:[%s233 + $0x68] sm:$0xff]
    %v248 = vld [vmem:[%s233 + $0x70] sm:$0xff]
    %v249 = vld [vmem:[%s233 + $0x78] sm:$0xff]
    %s250 = scalar_lea.vmem %s4, 1
    %v251 = vld [vmem:[%s250] sm:$0x1]
    %v253 = vlaneseq
    %v254 = vshrl.u32 %v253, 7
    %v255 = vsub.s32 0, %v254
    %v256 = vrot.slane %v251, %v255
    %258 = vmatprep.subr.mxu0 0.0
    %259 = vmatpush1.msra.mxu0 %v234
    %260 = vmatprep.subr.mxu0 0.0
    %261 = vmatpush1.msra.mxu0 %v235
    %262 = vmatprep.subr.mxu0 0.0
    %263 = vmatpush1.msra.mxu0 %v236
    %264 = vmatprep.subr.mxu0 0.0
    %265 = vmatpush1.msra.mxu0 %v237
    %266 = vmatprep.subr.mxu0 0.0
    %267 = vmatpush1.msra.mxu0 %v238
    %268 = vmatprep.subr.mxu0 0.0
    %269 = vmatpush1.msra.mxu0 %v239
    %270 = vmatprep.subr.mxu0 0.0
    %271 = vmatpush1.msra.mxu0 %v240
    %272 = vmatprep.subr.mxu0 0.0
    %273 = vmatpush1.msra.mxu0 %v241
    %274 = vmatprep.subr.mxu0 0.0
    %275 = vmatpush1.msra.mxu0 %v242
    %276 = vmatprep.subr.mxu0 0.0
    %277 = vmatpush1.msra.mxu0 %v243
    %278 = vmatprep.subr.mxu0 0.0
    %279 = vmatpush1.msra.mxu0 %v244
    %280 = vmatprep.subr.mxu0 0.0
    %281 = vmatpush1.msra.mxu0 %v245
    %282 = vmatprep.subr.mxu0 0.0
    %283 = vmatpush1.msra.mxu0 %v246
    %284 = vmatprep.subr.mxu0 0.0
    %285 = vmatpush1.msra.mxu0 %v247
    %286 = vmatprep.subr.mxu0 0.0
    %287 = vmatpush1.msra.mxu0 %v248
    %288 = vmatprep.subr.mxu0 0.0
    %289 = vmatpush1.msra.mxu0 %v249
    %290 = vmatprep.subr.mxu0 0.0
    %291 = vmatpush1.msra.mxu0 0.0
    %292 = vmatprep.subr.mxu0 0.0
    %293 = vmatpush1.msra.mxu0 0.0
    %294 = vmatprep.subr.mxu0 0.0
    %295 = vmatpush1.msra.mxu0 0.0
    %296 = vmatprep.subr.mxu0 0.0
    %297 = vmatpush1.msra.mxu0 0.0
    %298 = vmatprep.subr.mxu0 0.0
    %299 = vmatpush1.msra.mxu0 0.0
    %300 = vmatprep.subr.mxu0 0.0
    %301 = vmatpush1.msra.mxu0 0.0
    %302 = vmatprep.subr.mxu0 0.0
    %303 = vmatpush1.msra.mxu0 0.0
    %304 = vmatprep.subr.mxu0 0.0
    %305 = vmatpush1.msra.mxu0 0.0
    %306 = vmatprep.subr.mxu0 0.0
    %307 = vmatpush1.msra.mxu0 0.0
    %308 = vmatprep.subr.mxu0 0.0
    %309 = vmatpush1.msra.mxu0 0.0
    %310 = vmatprep.subr.mxu0 0.0
    %311 = vmatpush1.msra.mxu0 0.0
    %312 = vmatprep.subr.mxu0 0.0
    %313 = vmatpush1.msra.mxu0 0.0
    %314 = vmatprep.subr.mxu0 0.0
    %315 = vmatpush1.msra.mxu0 0.0
    %316 = vmatprep.subr.mxu0 0.0
    %317 = vmatpush1.msra.mxu0 0.0
    %318 = vmatprep.subr.mxu0 0.0
    %319 = vmatpush1.msra.mxu0 0.0
    %320 = vmatprep.subr.mxu0 0.0
    %321 = vmatpush1.msra.mxu0 0.0
    %322 = vmatprep.mubr.f32.mxu0 0.0
    %323 = vmatmul.mubr.f32.gmra.mrb[0].mxu0 %v232
    %v324 = vpop.f32.mrb[0].mxu0
    %v325 = vadd.f32 %v256, %v324
    %v326 = vpop.f32.mrb[0].mxu0
    %327 = vdwg.mxu0
    %v328 = vmax.f32 %v325, 0.0
    %v329 = vld [vmem:[#allocation4] sm:$0xff]
    %v330 = vld [vmem:[#allocation4 + $0x8] sm:$0xff]
    %v331 = vld [vmem:[#allocation4 + $0x10] sm:$0xff]
    %v332 = vld [vmem:[#allocation4 + $0x18] sm:$0xff]
    %v333 = vld [vmem:[#allocation4 + $0x20] sm:$0xff]
    %v334 = vld [vmem:[#allocation4 + $0x28] sm:$0xff]
    %v335 = vld [vmem:[#allocation4 + $0x30] sm:$0xff]
    %v336 = vld [vmem:[#allocation4 + $0x38] sm:$0xff]
    %v337 = vld [vmem:[#allocation4 + $0x40] sm:$0xff]
    %v338 = vld [vmem:[#allocation4 + $0x48] sm:$0xff]
    %v339 = vld [vmem:[#allocation4 + $0x50] sm:$0xff]
    %v340 = vld [vmem:[#allocation4 + $0x58] sm:$0xff]
    %v341 = vld [vmem:[#allocation4 + $0x60] sm:$0xff]
    %v342 = vld [vmem:[#allocation4 + $0x68] sm:$0xff]
    %v343 = vld [vmem:[#allocation4 + $0x70] sm:$0xff]
    %v344 = vld [vmem:[#allocation4 + $0x78] sm:$0xff]
    %v345 = vld [vmem:[%s6] sm:$0x1]
    %v347 = vlaneseq
    %v348 = vshrl.u32 %v347, 7
    %v349 = vsub.s32 0, %v348
    %v350 = vrot.slane %v345, %v349
    %352 = vmatprep.subr.mxu0 0.0
    %353 = vmatpush1.msra.mxu0 %v329
    %354 = vmatprep.subr.mxu0 0.0
    %355 = vmatpush1.msra.mxu0 %v330
    %356 = vmatprep.subr.mxu0 0.0
    %357 = vmatpush1.msra.mxu0 %v331
    %358 = vmatprep.subr.mxu0 0.0
    %359 = vmatpush1.msra.mxu0 %v332
    %360 = vmatprep.subr.mxu0 0.0
    %361 = vmatpush1.msra.mxu0 %v333
    %362 = vmatprep.subr.mxu0 0.0
    %363 = vmatpush1.msra.mxu0 %v334
    %364 = vmatprep.subr.mxu0 0.0
    %365 = vmatpush1.msra.mxu0 %v335
    %366 = vmatprep.subr.mxu0 0.0
    %367 = vmatpush1.msra.mxu0 %v336
    %368 = vmatprep.subr.mxu0 0.0
    %369 = vmatpush1.msra.mxu0 %v337
    %370 = vmatprep.subr.mxu0 0.0
    %371 = vmatpush1.msra.mxu0 %v338
    %372 = vmatprep.subr.mxu0 0.0
    %373 = vmatpush1.msra.mxu0 %v339
    %374 = vmatprep.subr.mxu0 0.0
    %375 = vmatpush1.msra.mxu0 %v340
    %376 = vmatprep.subr.mxu0 0.0
    %377 = vmatpush1.msra.mxu0 %v341
    %378 = vmatprep.subr.mxu0 0.0
    %379 = vmatpush1.msra.mxu0 %v342
    %380 = vmatprep.subr.mxu0 0.0
    %381 = vmatpush1.msra.mxu0 %v343
    %382 = vmatprep.subr.mxu0 0.0
    %383 = vmatpush1.msra.mxu0 %v344
    %384 = vmatprep.subr.mxu0 0.0
    %385 = vmatpush1.msra.mxu0 0.0
    %386 = vmatprep.subr.mxu0 0.0
    %387 = vmatpush1.msra.mxu0 0.0
    %388 = vmatprep.subr.mxu0 0.0
    %389 = vmatpush1.msra.mxu0 0.0
    %390 = vmatprep.subr.mxu0 0.0
    %391 = vmatpush1.msra.mxu0 0.0
    %392 = vmatprep.subr.mxu0 0.0
    %393 = vmatpush1.msra.mxu0 0.0
    %394 = vmatprep.subr.mxu0 0.0
    %395 = vmatpush1.msra.mxu0 0.0
    %396 = vmatprep.subr.mxu0 0.0
    %397 = vmatpush1.msra.mxu0 0.0
    %398 = vmatprep.subr.mxu0 0.0
    %399 = vmatpush1.msra.mxu0 0.0
    %400 = vmatprep.subr.mxu0 0.0
    %401 = vmatpush1.msra.mxu0 0.0
    %402 = vmatprep.subr.mxu0 0.0
    %403 = vmatpush1.msra.mxu0 0.0
    %404 = vmatprep.subr.mxu0 0.0
    %405 = vmatpush1.msra.mxu0 0.0
    %406 = vmatprep.subr.mxu0 0.0
    %407 = vmatpush1.msra.mxu0 0.0
    %408 = vmatprep.subr.mxu0 0.0
    %409 = vmatpush1.msra.mxu0 0.0
    %410 = vmatprep.subr.mxu0 0.0
    %411 = vmatpush1.msra.mxu0 0.0
    %412 = vmatprep.subr.mxu0 0.0
    %413 = vmatpush1.msra.mxu0 0.0
    %414 = vmatprep.subr.mxu0 0.0
    %415 = vmatpush1.msra.mxu0 0.0
    %416 = vmatprep.mubr.f32.mxu0 0.0
    %417 = vmatmul.mubr.f32.gmra.mrb[0].mxu0 %v328
    %v418 = vpop.f32.mrb[0].mxu0
    %v419 = vadd.f32 %v350, %v418
    %v420 = vpop.f32.mrb[0].mxu0
    %421 = vdwg.mxu0
    %v422 = vlaneseq
    %v423 = vand.u32 %v422, 127
    %vm424 = vcmp.lt.s32.totalorder %v423, 64
    %v425 = vtanh.pop %v419
    %v426 = vmul.f32 %v419, 1.442695
    %v427 = vpow.pop %v426
    %v428 = vsel %vm424, %v425, %v427
    %429 = vst [vmem:[%s7] sm:$0xff] %v428
    // Predicated region
    $region38: #{actor_prob_forward.1} parent=1 // pred_check
      _
    $region39: #{actor_prob_forward.1} parent=1 // pred_check_branch
      %431 = sbr.rel (0) target = $region41
    $region40: #{actor_prob_forward.1} parent=1 // pred_region
      _
    $region41: #{actor_prob_forward.1} parent=1 // pred_fallthru
      _
    // Predicated region
    $region42: #{actor_prob_forward.1} parent=1 // pred_check
      _
    $region43: #{actor_prob_forward.1} parent=1 // pred_check_branch
      %433 = sbr.rel (0) target = $region45
    $region44: #{actor_prob_forward.1} parent=1 // pred_region
      _
    $region45: #{actor_prob_forward.1} parent=1 // pred_fallthru
      _
    %434 = vsyncpa [#allocation3], 1
    %435 = vsyncpa [#allocation5], 1

</llo_original>
